<compile_context>
chip_gen: v7x
topology: tpu7x:2x2x1
jax: 0.10.0
libtpu: 0.0.40
codegen_flags: <defaults>
</compile_context>

<pallas_src>
import functools

import jax
import jax.numpy as jnp
from jax.experimental import pallas as pl
from jax.experimental.pallas import tpu as pltpu


def _round_up(x, m):
    return ((x + m - 1) // m) * m


def _encoder_kernel(*refs, use_bias, layernorm, has_x, pack, out_dim, ln_eps):
    it = iter(refs)
    mmsbm_ref = next(it)
    w_ref = next(it)
    b_ref = next(it) if use_bias else None
    g_ref = next(it) if layernorm else None
    beta_ref = next(it) if layernorm else None
    x_ref = next(it) if has_x else None
    out_ref = next(it)

    # Linear: (TM, pack*emb) @ (pack*emb, pack*out) -> (TM, pack*out), f32 accumulate on MXU.
    h = jnp.dot(mmsbm_ref[...].astype(jnp.float32), w_ref[...],
                preferred_element_type=jnp.float32)
    if use_bias:
        h = h + b_ref[...]                       # (1, pack*out) broadcast over rows

    if layernorm:
        d = float(out_dim)
        if pack > 1:
            # Rows are lane-packed (`pack` original rows per kernel row): normalize per
            # out_dim-wide lane segment.  A single 128x128 block matrix performs the
            # segment-mean + broadcast-back in one MXU op (compute has huge slack here).
            width = h.shape[-1]
            seg_i = jax.lax.broadcasted_iota(jnp.int32, (width, width), 0) // out_dim
            seg_j = jax.lax.broadcasted_iota(jnp.int32, (width, width), 1) // out_dim
            m_mat = jnp.where(seg_i == seg_j, 1.0 / d, 0.0).astype(jnp.float32)
            mean = jnp.dot(h, m_mat, preferred_element_type=jnp.float32)
            ex2 = jnp.dot(h * h, m_mat, preferred_element_type=jnp.float32)
        else:
            mean = jnp.mean(h, axis=-1, keepdims=True)
            ex2 = jnp.mean(h * h, axis=-1, keepdims=True)
        var = jnp.maximum(ex2 - mean * mean, 0.0)        # fused single-pass variance
        h = (h - mean) * jax.lax.rsqrt(var + ln_eps)     # rsqrt lands in the EUP slot
        h = h * g_ref[...] + beta_ref[...]               # learned LayerNorm affine

    if has_x:
        h = x_ref[...] + h                               # residual: batch.x + encoding
    out_ref[...] = h.astype(out_ref.dtype)


def mmsbm_linear_node_encoder(mmsbm, weight_t, bias=None, x=None,
                              ln_gamma=None, ln_beta=None, *,
                              layernorm=False, ln_eps=1e-5,
                              tile_rows=1024, lane_pack=True,
                              out_dtype=jnp.float32):
    """Fused Linear(+bias)(+LayerNorm)+residual node encoder.

    mmsbm:     (N, emb_dim), any float dtype (cast to f32 in-kernel, like .float()).
    weight_t:  (emb_dim, out_dim)  == fc.weight.T
    bias:      (out_dim,) or None
    x:         (N, out_dim) or None   (None -> batch.x = encoding branch)
    ln_gamma / ln_beta: (out_dim,), required when layernorm=True.
    Only the identity / LayerNorm configs are supported (BatchNorm branch is dead code).
    """
    N, emb_dim = mmsbm.shape
    out_dim = weight_t.shape[1]
    has_x = x is not None
    use_bias = bias is not None
    if layernorm:
        assert ln_gamma is not None and ln_beta is not None

    # ---- lane packing: fold `pack` rows into one 128-lane row when out_dim < 128 ----
    pack = 1
    if lane_pack and out_dim < 128 and 128 % out_dim == 0:
        pack = 128 // out_dim
    pe, po = pack * emb_dim, pack * out_dim

    # ---- tile selection (in packed-row units) ----
    rows = pl.cdiv(N, pack)
    in_bytes = jnp.dtype(mmsbm.dtype).itemsize
    row_bytes = pe * in_bytes + po * 4 * (2 if has_x else 1)   # mmsbm + x + out per row
    vmem_budget = 24 << 20          # double-buffered row tiles; safe on v7x's 64 MiB VMEM
    cap = max(8, (vmem_budget // (2 * row_bytes)) // 8 * 8)
    tile = max(8, min(tile_rows, cap) // 8 * 8)
    # keep >= ~4 grid steps when N allows (pipelining + both v7x TensorCores busy)
    tile = min(tile, max(8, _round_up(pl.cdiv(rows, 4), 8)))
    rows_pad = _round_up(rows, tile)
    n_pad = rows_pad * pack
    grid = rows_pad // tile

    # ---- wrapper-side padding / lane-packing reshapes ----
    if n_pad != N:
        mmsbm = jnp.pad(mmsbm, ((0, n_pad - N), (0, 0)))
        if has_x:
            x = jnp.pad(x, ((0, n_pad - N), (0, 0)))
    if pack > 1:
        mmsbm = mmsbm.reshape(rows_pad, pe)
        if has_x:
            x = x.reshape(rows_pad, po)
        # block-diagonal weight: [m_i | m_{i+1} | ...] @ diag(W, W, ...) = [m_i W | ...]
        weight_t = jnp.kron(jnp.eye(pack, dtype=weight_t.dtype), weight_t)

    def _tile_vec(v):
        v = v.reshape(1, out_dim).astype(jnp.float32)
        return jnp.tile(v, (1, pack)) if pack > 1 else v

    operands = [mmsbm, weight_t.astype(jnp.float32)]
    in_specs = [
        pl.BlockSpec((tile, pe), lambda i: (i, 0)),       # mmsbm row tile
        pl.BlockSpec((pe, po), lambda i: (0, 0)),         # weight, VMEM-resident
    ]
    if use_bias:
        operands.append(_tile_vec(bias))
        in_specs.append(pl.BlockSpec((1, po), lambda i: (0, 0)))
    if layernorm:
        operands.append(_tile_vec(ln_gamma))
        in_specs.append(pl.BlockSpec((1, po), lambda i: (0, 0)))
        operands.append(_tile_vec(ln_beta))
        in_specs.append(pl.BlockSpec((1, po), lambda i: (0, 0)))
    aliases = {}
    if has_x:
        aliases = {len(operands): 0}                      # donate x's buffer to the output
        operands.append(x.astype(out_dtype))
        in_specs.append(pl.BlockSpec((tile, po), lambda i: (i, 0)))

    kernel = functools.partial(
        _encoder_kernel, use_bias=use_bias, layernorm=layernorm, has_x=has_x,
        pack=pack, out_dim=out_dim, ln_eps=ln_eps)

    bytes_accessed = (mmsbm.size * in_bytes + weight_t.size * 4
                      + (x.size * 4 if has_x else 0) + rows_pad * po * 4)
    cost = pl.CostEstimate(flops=2 * N * emb_dim * out_dim,
                           transcendentals=(N if layernorm else 0),
                           bytes_accessed=int(bytes_accessed))

    dbl = 2 * tile * row_bytes                            # double-buffered row tiles
    resident = 4 * (pe * po + 3 * po)                     # weight + bias/gamma/beta
    vmem_limit = int(min(max(dbl + resident + (8 << 20), 32 << 20), 56 << 20))

    out = pl.pallas_call(
        kernel,
        out_shape=jax.ShapeDtypeStruct((rows_pad, po), out_dtype),
        grid_spec=pl.GridSpec(
            grid=(grid,),
            in_specs=in_specs,
            out_specs=pl.BlockSpec((tile, po), lambda i: (i, 0)),
        ),
        input_output_aliases=aliases,
        compiler_params=pltpu.CompilerParams(
            dimension_semantics=("parallel",),
            vmem_limit_bytes=vmem_limit),
        cost_estimate=cost,
    )(*operands)

    out = out.reshape(n_pad, out_dim)
    return out[:N] if n_pad != N else out


def _xavier_uniform(key, fan_out, fan_in, dtype=jnp.float32):
    # torch.nn.init.xavier_uniform_ on nn.Linear.weight of shape (out_dim, emb_dim)
    bound = (6.0 / (fan_in + fan_out)) ** 0.5
    return jax.random.uniform(key, (fan_out, fan_in), dtype, -bound, bound)


if __name__ == "__main__":
    # Small shapes consistent with the module; ragged N exercises the cdiv/pad path.
    N, emb_dim, out_dim = 300, 32, 64
    ln_eps = 1e-5

    key = jax.random.PRNGKey(0)
    k_w, k_b, k_g, k_bt, k_m, k_x = jax.random.split(key, 6)

    weight = _xavier_uniform(k_w, out_dim, emb_dim)       # nn.Linear weight (out, emb)
    weight_t = weight.T                                   # (emb, out) for the kernel
    bias = 0.1 * jax.random.normal(k_b, (out_dim,), jnp.float32)
    gamma = 1.0 + 0.1 * jax.random.normal(k_g, (out_dim,), jnp.float32)
    beta = 0.1 * jax.random.normal(k_bt, (out_dim,), jnp.float32)
    mmsbm = jax.random.normal(k_m, (N, emb_dim), jnp.float32)   # batch['mmsbm'].float()
    x = jax.random.normal(k_x, (N, out_dim), jnp.float32)       # batch.x

    # Pure-JAX references (computed before the kernel calls; x may be donated/aliased).
    h_lin = mmsbm @ weight_t
    ref1 = x + h_lin                                      # default config
    h_b = h_lin + bias
    mu = h_b.mean(-1, keepdims=True)
    var = ((h_b - mu) ** 2).mean(-1, keepdims=True)
    ref_ln = (h_b - mu) / jnp.sqrt(var + ln_eps) * gamma + beta
    ref2 = x + ref_ln                                     # bias + layernorm config
    ref3 = h_lin                                          # 'x' not in batch

    # 1) default config: Linear only + residual, lane-packed output.
    out1 = mmsbm_linear_node_encoder(mmsbm, weight_t, x=x)
    # 2) bias + LayerNorm (learned affine), lane-packed per-segment LayerNorm.
    out2 = mmsbm_linear_node_encoder(mmsbm, weight_t, bias=bias, x=x,
                                     ln_gamma=gamma, ln_beta=beta,
                                     layernorm=True, ln_eps=ln_eps)
    # 3) 'x' not in batch: output is just the encoding.
    out3 = mmsbm_linear_node_encoder(mmsbm, weight_t)
    # 4) unpacked fallback path (lane_pack disabled) with LayerNorm.
    out4 = mmsbm_linear_node_encoder(mmsbm, weight_t, bias=bias, x=x,
                                     ln_gamma=gamma, ln_beta=beta,
                                     layernorm=True, ln_eps=ln_eps, lane_pack=False)
    jax.block_until_ready((out1, out2, out3, out4))

    assert out1.shape == (N, out_dim)
    assert jnp.allclose(out1, ref1, atol=1e-4, rtol=1e-4), "linear+residual mismatch"
    assert jnp.allclose(out2, ref2, atol=1e-4, rtol=1e-4), "bias+layernorm mismatch"
    assert jnp.allclose(out3, ref3, atol=1e-4, rtol=1e-4), "no-x branch mismatch"
    assert jnp.allclose(out4, ref2, atol=1e-4, rtol=1e-4), "unpacked layernorm mismatch"

    print("KERNEL_OK")
</pallas_src>

<mosaic_0001>
module attributes {stable_mosaic.version = 11 : i64} {
  func.func @_encoder_kernel(%arg0: i32, %arg1: memref<40x64xf32, #tpu.memory_space<vmem>>, %arg2: memref<64x128xf32, #tpu.memory_space<vmem>>, %arg3: memref<40x128xf32, #tpu.memory_space<vmem>>, %arg4: memref<40x128xf32, #tpu.memory_space<vmem>>) attributes {dimension_semantics = [#tpu.dimension_semantics<parallel>], iteration_bounds = array<i64: 4>, scalar_prefetch = 0 : i64, scratch_operands = 0 : i64, tpu.core_type = #tpu.core_type<tc>, window_params = [{transform_indices = @transform_0, window_bounds = array<i64: 40, 64>}, {pipeline_mode = #tpu.pipeline_mode<synchronous>, transform_indices = @transform_1, window_bounds = array<i64: 64, 128>}, {transform_indices = @transform_2, window_bounds = array<i64: 40, 128>}, {transform_indices = @transform_3, window_bounds = array<i64: 40, 128>}]} {
    %c0 = arith.constant 0 : index
    %c0_0 = arith.constant 0 : index
    %0 = vector.load %arg1[%c0, %c0_0] : memref<40x64xf32, #tpu.memory_space<vmem>>, vector<40x64xf32>
    %c0_1 = arith.constant 0 : index
    %c0_2 = arith.constant 0 : index
    %1 = vector.load %arg2[%c0_1, %c0_2] : memref<64x128xf32, #tpu.memory_space<vmem>>, vector<64x128xf32>
    %cst = arith.constant dense<0.000000e+00> : vector<40x128xf32>
    %2 = tpu.matmul %0, %1, %cst {dimension_numbers = #tpu.dot_dimension_numbers<[1], [0], [0], [1], [0, 0, 1, 1], [], []>} : vector<40x64xf32>, vector<64x128xf32>, vector<40x128xf32> -> vector<40x128xf32>
    %c0_3 = arith.constant 0 : index
    %c0_4 = arith.constant 0 : index
    %3 = vector.load %arg3[%c0_3, %c0_4] : memref<40x128xf32, #tpu.memory_space<vmem>>, vector<40x128xf32>
    %4 = arith.addf %3, %2 : vector<40x128xf32>
    %c0_5 = arith.constant 0 : index
    %c0_6 = arith.constant 0 : index
    %5 = vector.load %arg4[%c0_5, %c0_6] : memref<40x128xf32, #tpu.memory_space<vmem>>, vector<40x128xf32>
    tpu.vector_store %arg4[%c0_5, %c0_6], %4 {strides = array<i32>} : memref<40x128xf32, #tpu.memory_space<vmem>>, vector<40x128xf32>,
    return
  }
  func.func @transform_0(%arg0: i32) -> (i32, i32) {
    %c0_i32 = arith.constant 0 : i32
    %c0_i32_0 = arith.constant 0 : i32
    return %arg0, %c0_i32 : i32, i32
  }
  func.func @transform_1(%arg0: i32) -> (i32, i32) {
    %c0_i32 = arith.constant 0 : i32
    %c0_i32_0 = arith.constant 0 : i32
    %c0_i32_1 = arith.constant 0 : i32
    return %c0_i32, %c0_i32_0 : i32, i32
  }
  func.func @transform_2(%arg0: i32) -> (i32, i32) {
    %c0_i32 = arith.constant 0 : i32
    %c0_i32_0 = arith.constant 0 : i32
    return %arg0, %c0_i32 : i32, i32
  }
  func.func @transform_3(%arg0: i32) -> (i32, i32) {
    %c0_i32 = arith.constant 0 : i32
    %c0_i32_0 = arith.constant 0 : i32
    return %arg0, %c0_i32 : i32, i32
  }
}

</mosaic_0001>

<llo_original>
// kernel: tpu_custom_call.1
$region0: #{tpu_custom_call.1}
  #allocation0 [shape = 'u32[]', space=smem, size = 0x4, offset = 0x4, fixed_abs, tag = 'smem constant byte address 0x4 - core index']
  #allocation1 [shape = 'u32[144,128]{1,0:T(1,128)}', space=vmem, size = 0x12000, scoped, tag = 'internal scratch']
  %s0 = inlined_call_operand.vmem [shape: f32[160,64], index: 0, kind: input, shape index: {}]
  %s1 = inlined_call_operand.vmem [shape: f32[64,128], index: 1, kind: input, shape index: {}]
  %s2 = inlined_call_operand.hbm [shape: f32[160,128], index: 2, kind: input, shape index: {}, may-alias: {2,3}]
  %s3 = inlined_call_operand.hbm [shape: f32[160,128], index: 3, kind: output, shape index: {}, may-alias: {2,3}]
  %s4 = sld [smem:[#allocation0]]
  $region49: #{tpu_custom_call.1} parent=0
    _
  %s6 = ssub.s32 1, %s4
  %s7 = scalar_select 0, %s6, %s4
  $region1: #{tpu_custom_call.1} parent=0
    #allocation2 [shape = 'u8[40960]{0}', space=vmem, size = 0xa000, scoped, tag = 'input window, operand 2']
    #allocation3 [shape = 's32[2]{0}', space=sflag, size = 0x8, scoped, tag = 'scoped memory for tpu_custom_call.1']
    #allocation4 [shape = 's32[2]{0}', space=sflag, size = 0x8, scoped, tag = 'scoped memory for tpu_custom_call.1']
    #allocation5 [shape = 'u8[40960]{0}', space=vmem, size = 0xa000, scoped, tag = 'output window, operand 0']
    %8 = vsyncpa [#allocation3], 0
    %s9 = scalar_lea.sflag [#allocation3], 1
    %10 = vsyncpa %s9, 0
    %11 = vsyncpa [#allocation4], 0
    %s12 = scalar_lea.sflag [#allocation4], 1
    %13 = vsyncpa %s12, 0
    loop: start=0, step=1, limit=6
    $region2: #{tpu_custom_call.1} parent=1 // loop_pre_header
      _
    $region3: #{tpu_custom_call.1} parent=1 // loop_header
      %s15 = sphi 0, %s19
      %p16 = scmp.ge.s32.totalorder %s15, 6
      %s25 = sphi 0, %s27
      %s28 = sphi 0, %s25
      %s29 = sphi 0, %s28
      %s45 = sphi 0, %s29
      %s49 = sphi 0, %s49
      %s51 = sphi 0, %s49
      %s52 = sphi 0, %s51
      %s66 = sphi 0, %s52
      %s72 = sphi 0, %s74
      %s75 = sphi 0, %s72
      %s76 = sphi 0, %s75
      %s92 = sphi 0, %s76
      %s98 = sphi 0, %s100
      %s101 = sphi 0, %s98
      %s102 = sphi 0, %s101
      %s118 = sphi 0, %s102
    $region4: #{tpu_custom_call.1} parent=1 // loop_header_branch
      %18 = sbr.rel (%p16) target = $region8
    $region5: #{tpu_custom_call.1} parent=1 // loop_body
      %s20 = ssub.s32 %s15, 1
      %s21 = ssub.s32 %s15, 2
      %s22 = sadd.s32 %s15, 1
      %s23 = ssub.s32 %s15, %s22
      %p24 = scmp.eq.s32.totalorder %s23, 0
      %s26 = sadd.s32 %s25, 1
      %s27 = scalar_select %p24, %s25, %s26
      %p30 = pneg %p24
      %p31 = scmp.eq.s32.totalorder %s15, 3
      %p32 = por %p30, %p31
      %p33 = scmp.ne.s32.totalorder %s25, %s28
      %p34 = scmp.eq.s32.totalorder %s15, 0
      %p35 = por %p33, %p34
      %p36 = scmp.ne.s32.totalorder %s25, %s28
      %p37 = scmp.eq.s32.totalorder %s20, 3
      %p38 = por %p36, %p37
      %p39 = scmp.ne.s32.totalorder %s28, %s29
      %p40 = scmp.eq.s32.totalorder %s20, 0
      %p41 = por %p39, %p40
      %p42 = scmp.ne.s32.totalorder %s28, %s29
      %p43 = scmp.eq.s32.totalorder %s21, 3
      %p44 = por %p42, %p43
      %p46 = scmp.ne.s32.totalorder %s29, %s45
      %p47 = scmp.eq.s32.totalorder %s21, 0
      %p48 = por %p46, %p47
      %s50 = sadd.s32 %s49, 1
      %p53 = scmp.eq.s32.totalorder %s15, 3
      %p54 = scmp.ne.s32.totalorder %s49, %s51
      %p55 = scmp.eq.s32.totalorder %s15, 0
      %p56 = por %p54, %p55
      %p57 = scmp.ne.s32.totalorder %s49, %s51
      %p58 = scmp.eq.s32.totalorder %s20, 3
      %p59 = por %p57, %p58
      %p60 = scmp.ne.s32.totalorder %s51, %s52
      %p61 = scmp.eq.s32.totalorder %s20, 0
      %p62 = por %p60, %p61
      %p63 = scmp.ne.s32.totalorder %s51, %s52
      %p64 = scmp.eq.s32.totalorder %s21, 3
      %p65 = por %p63, %p64
      %p67 = scmp.ne.s32.totalorder %s52, %s66
      %p68 = scmp.eq.s32.totalorder %s21, 0
      %p69 = por %p67, %p68
      %s70 = ssub.s32 %s15, %s22
      %p71 = scmp.eq.s32.totalorder %s70, 0
      %s73 = sadd.s32 %s72, 1
      %s74 = scalar_select %p71, %s72, %s73
      %p77 = pneg %p71
      %p78 = scmp.eq.s32.totalorder %s15, 3
      %p79 = por %p77, %p78
      %p80 = scmp.ne.s32.totalorder %s72, %s75
      %p81 = scmp.eq.s32.totalorder %s15, 0
      %p82 = por %p80, %p81
      %p83 = scmp.ne.s32.totalorder %s72, %s75
      %p84 = scmp.eq.s32.totalorder %s20, 3
      %p85 = por %p83, %p84
      %p86 = scmp.ne.s32.totalorder %s75, %s76
      %p87 = scmp.eq.s32.totalorder %s20, 0
      %p88 = por %p86, %p87
      %p89 = scmp.ne.s32.totalorder %s75, %s76
      %p90 = scmp.eq.s32.totalorder %s21, 3
      %p91 = por %p89, %p90
      %p93 = scmp.ne.s32.totalorder %s76, %s92
      %p94 = scmp.eq.s32.totalorder %s21, 0
      %p95 = por %p93, %p94
      %s96 = ssub.s32 %s15, %s22
      %p97 = scmp.eq.s32.totalorder %s96, 0
      %s99 = sadd.s32 %s98, 1
      %s100 = scalar_select %p97, %s98, %s99
      %p103 = pneg %p97
      %p104 = scmp.eq.s32.totalorder %s15, 3
      %p105 = por %p103, %p104
      %p106 = scmp.ne.s32.totalorder %s98, %s101
      %p107 = scmp.eq.s32.totalorder %s15, 0
      %p108 = por %p106, %p107
      %p109 = scmp.ne.s32.totalorder %s98, %s101
      %p110 = scmp.eq.s32.totalorder %s20, 3
      %p111 = por %p109, %p110
      %p112 = scmp.ne.s32.totalorder %s101, %s102
      %p113 = scmp.eq.s32.totalorder %s20, 0
      %p114 = por %p112, %p113
      %p115 = scmp.ne.s32.totalorder %s101, %s102
      %p116 = scmp.eq.s32.totalorder %s21, 3
      %p117 = por %p115, %p116
      %p119 = scmp.ne.s32.totalorder %s102, %s118
      %p120 = scmp.eq.s32.totalorder %s21, 0
      %p121 = por %p119, %p120
      %p122 = scmp.le.s32.totalorder 1, %s15
      %p123 = scmp.lt.s32.totalorder %s15, 5
      %p124 = pnand %p122, %p123
      %p125 = pneg %p124
      // Predicated region
      $region9: #{tpu_custom_call.1} parent=5 // pred_check
        _
      $region10: #{tpu_custom_call.1} parent=5 // pred_check_branch
        %127 = sbr.rel (%p124) target = $region12
      $region11: #{tpu_custom_call.1} parent=5 // pred_region
        %s128 = ssub.s32 %s15, 1
        // Predicated region
        $region13: #{tpu_custom_call.1} parent=11 // pred_check
          %p129 = pneg %p62
        $region14: #{tpu_custom_call.1} parent=11 // pred_check_branch
          %131 = sbr.rel (%p129) target = $region16
        $region15: #{tpu_custom_call.1} parent=11 // pred_region
          _
        $region16: #{tpu_custom_call.1} parent=11 // pred_fallthru
          _
      $region12: #{tpu_custom_call.1} parent=5 // pred_fallthru
        _
      %p132 = scmp.lt.s32.totalorder %s15, 4
      // Predicated region
      $region17: #{tpu_custom_call.1} parent=5 // pred_check
        %p133 = pneg %p132
      $region18: #{tpu_custom_call.1} parent=5 // pred_check_branch
        %135 = sbr.rel (%p133) target = $region20
      $region19: #{tpu_custom_call.1} parent=5 // pred_region
        // Predicated region
        $region21: #{tpu_custom_call.1} parent=19 // pred_check
          %p136 = pneg %p35
        $region22: #{tpu_custom_call.1} parent=19 // pred_check_branch
          %138 = sbr.rel (%p136) target = $region24
        $region23: #{tpu_custom_call.1} parent=19 // pred_region
          %s139 = smul.u32 5, %s15
          %p140 = scmp.lt.s32.totalorder %s139, 19
          %s141 = scalar_select %p140, %s139, 19
          %s142 = smul.addr %s141, 8
          %s143 = scalar_lea.vmem %s0, %s142
          %s144 = smul.u32 5, %s15
        $region24: #{tpu_custom_call.1} parent=19 // pred_fallthru
          _
        // Predicated region
        $region25: #{tpu_custom_call.1} parent=19 // pred_check
          %p145 = pneg %p82
        $region26: #{tpu_custom_call.1} parent=19 // pred_check_branch
          %147 = sbr.rel (%p145) target = $region28
        $region27: #{tpu_custom_call.1} parent=19 // pred_region
          %s148 = sand.u32 %s72, 1
          %s149 = scalar_lea.sflag [#allocation3], %s148
          %s150 = sand.u32 %s72, 1
          %s151 = smul.addr %s150, 40
          %s152 = scalar_lea.vmem [#allocation2], %s151
          %s153 = smul.u32 5, %s15
          %s155 = ssub.s32 640, 640
          %156 = vsyncadd %s149, %s155
          %s157 = smul.addr %s153, 128
          %s158 = scalar_lea.hbm %s2, %s157
          %s159 = sshll.u32 %s152, 4
          %s160 = int_to_ptr.vmem [resolvable:$true] %s159
          %165 = dma.hbm_to_vmem [thread:$0]  %s158, 640, %s160, %s149, 128, 128, 8
        $region28: #{tpu_custom_call.1} parent=19 // pred_fallthru
          _
      $region20: #{tpu_custom_call.1} parent=5 // pred_fallthru
        _
      %p166 = scmp.le.s32.totalorder 1, %s15
      %p167 = scmp.lt.s32.totalorder %s15, 5
      %p168 = pnand %p166, %p167
      %p169 = pneg %p168
      // Predicated region
      $region29: #{tpu_custom_call.1} parent=5 // pred_check
        _
      $region30: #{tpu_custom_call.1} parent=5 // pred_check_branch
        %171 = sbr.rel (%p168) target = $region32
      $region31: #{tpu_custom_call.1} parent=5 // pred_region
        %s172 = ssub.s32 %s15, 1
        %s173 = sand.u32 %s75, 1
        %s174 = scalar_lea.sflag [#allocation3], %s173
        %s175 = sand.u32 %s75, 1
        %s176 = smul.addr %s175, 40
        %s177 = scalar_lea.vmem [#allocation2], %s176
        // Predicated region
        $region33: #{tpu_custom_call.1} parent=31 // pred_check
          %p178 = pneg %p88
        $region34: #{tpu_custom_call.1} parent=31 // pred_check_branch
          %180 = sbr.rel (%p178) target = $region36
        $region35: #{tpu_custom_call.1} parent=31 // pred_region
          %181 = dma.done %s174, 640
        $region36: #{tpu_custom_call.1} parent=31 // pred_fallthru
          _
        %s182 = smul.u32 5, %s20
        %p183 = scmp.lt.s32.totalorder %s182, 19
        %s184 = scalar_select %p183, %s182, 19
        %s185 = smul.addr %s184, 8
        %s186 = scalar_lea.vmem %s0, %s185
        %p187 = pneg %p41
        %p188 = pneg %p38
        %p189 = pneg %p62
        %p190 = pneg %p59
        %s191 = sand.u32 %s75, 1
        %s192 = scalar_lea.sflag [#allocation3], %s191
        %s193 = sand.u32 %s75, 1
        %s194 = smul.addr %s193, 40
        %s195 = scalar_lea.vmem [#allocation2], %s194
        %p196 = pneg %p88
        %p197 = pneg %p85
        %p198 = pneg %p114
        %p199 = pneg %p111
        %s200 = sand.u32 %s101, 1
        %s201 = scalar_lea.sflag [#allocation4], %s200
        %s202 = sand.u32 %s101, 1
        %s203 = smul.addr %s202, 40
        %s204 = scalar_lea.vmem [#allocation5], %s203
        %s205 = smul.u32 5, %s20
        %p206 = scmp.lt.s32.totalorder %s205, 19
        %s207 = scalar_select %p206, %s205, 19
        %s208 = smul.addr %s207, 8
        %s209 = scalar_lea.vmem %s0, %s208
        %s210 = smul.u32 5, %s20
        %s211 = smul.u32 5, %s20
        %s212 = smul.u32 5, %s20
        %v213 = vld [vmem:[%s209] sm:$0xff]
        %v214 = vld [vmem:[%s209 + $0x8] sm:$0xff]
        %v215 = vld [vmem:[%s209 + $0x10] sm:$0xff]
        %v216 = vld [vmem:[%s209 + $0x18] sm:$0xff]
        %v217 = vld [vmem:[%s209 + $0x20] sm:$0xff]
        %v218 = vld [vmem:[%s1] sm:$0xff]
        %v219 = vld [vmem:[%s1 + $0x8] sm:$0xff]
        %v220 = vld [vmem:[%s1 + $0x10] sm:$0xff]
        %v221 = vld [vmem:[%s1 + $0x18] sm:$0xff]
        %v222 = vld [vmem:[%s1 + $0x20] sm:$0xff]
        %v223 = vld [vmem:[%s1 + $0x28] sm:$0xff]
        %v224 = vld [vmem:[%s1 + $0x30] sm:$0xff]
        %v225 = vld [vmem:[%s1 + $0x38] sm:$0xff]
        %vm226 = vcmask 523264
        %v228 = vsel %vm226, %v213, 0
        %v231 = vsel %vm226, %v214, 0
        %v234 = vsel %vm226, %v215, 0
        %v237 = vsel %vm226, %v216, 0
        %v240 = vsel %vm226, %v217, 0
        %242 = vmatprep.subr.mxu0 0.0
        %243 = vmatpush1.msra.mxu0 %v218
        %244 = vmatprep.subr.mxu0 0.0
        %245 = vmatpush1.msra.mxu0 %v219
        %246 = vmatprep.subr.mxu0 0.0
        %247 = vmatpush1.msra.mxu0 %v220
        %248 = vmatprep.subr.mxu0 0.0
        %249 = vmatpush1.msra.mxu0 %v221
        %250 = vmatprep.subr.mxu0 0.0
        %251 = vmatpush1.msra.mxu0 %v222
        %252 = vmatprep.subr.mxu0 0.0
        %253 = vmatpush1.msra.mxu0 %v223
        %254 = vmatprep.subr.mxu0 0.0
        %255 = vmatpush1.msra.mxu0 %v224
        %256 = vmatprep.subr.mxu0 0.0
        %257 = vmatpush1.msra.mxu0 %v225
        %258 = vmatprep.subr.mxu0 0.0
        %259 = vmatpush1.msra.mxu0 0.0
        %260 = vmatprep.subr.mxu0 0.0
        %261 = vmatpush1.msra.mxu0 0.0
        %262 = vmatprep.subr.mxu0 0.0
        %263 = vmatpush1.msra.mxu0 0.0
        %264 = vmatprep.subr.mxu0 0.0
        %265 = vmatpush1.msra.mxu0 0.0
        %266 = vmatprep.subr.mxu0 0.0
        %267 = vmatpush1.msra.mxu0 0.0
        %268 = vmatprep.subr.mxu0 0.0
        %269 = vmatpush1.msra.mxu0 0.0
        %270 = vmatprep.subr.mxu0 0.0
        %271 = vmatpush1.msra.mxu0 0.0
        %272 = vmatprep.subr.mxu0 0.0
        %273 = vmatpush1.msra.mxu0 0.0
        %274 = vmatprep.subr.mxu0 0.0
        %275 = vmatpush1.msra.mxu0 0.0
        %276 = vmatprep.subr.mxu0 0.0
        %277 = vmatpush1.msra.mxu0 0.0
        %278 = vmatprep.subr.mxu0 0.0
        %279 = vmatpush1.msra.mxu0 0.0
        %280 = vmatprep.subr.mxu0 0.0
        %281 = vmatpush1.msra.mxu0 0.0
        %282 = vmatprep.subr.mxu0 0.0
        %283 = vmatpush1.msra.mxu0 0.0
        %284 = vmatprep.subr.mxu0 0.0
        %285 = vmatpush1.msra.mxu0 0.0
        %286 = vmatprep.subr.mxu0 0.0
        %287 = vmatpush1.msra.mxu0 0.0
        %288 = vmatprep.subr.mxu0 0.0
        %289 = vmatpush1.msra.mxu0 0.0
        %290 = vmatprep.subr.mxu0 0.0
        %291 = vmatpush1.msra.mxu0 0.0
        %292 = vmatprep.subr.mxu0 0.0
        %293 = vmatpush1.msra.mxu0 0.0
        %294 = vmatprep.subr.mxu0 0.0
        %295 = vmatpush1.msra.mxu0 0.0
        %296 = vmatprep.subr.mxu0 0.0
        %297 = vmatpush1.msra.mxu0 0.0
        %298 = vmatprep.subr.mxu0 0.0
        %299 = vmatpush1.msra.mxu0 0.0
        %300 = vmatprep.subr.mxu0 0.0
        %301 = vmatpush1.msra.mxu0 0.0
        %302 = vmatprep.subr.mxu0 0.0
        %303 = vmatpush1.msra.mxu0 0.0
        %304 = vmatprep.subr.mxu0 0.0
        %305 = vmatpush1.msra.mxu0 0.0
        %306 = vmatprep.mubr.f32.mxu0 0.0
        %307 = vmatmul.mubr.f32.gmra.mrb[0].mxu0 %v228
        %v308 = vpop.f32.mrb[0].mxu0
        %v309 = vadd.f32 0.0, %v308
        %v310 = vpop.f32.mrb[0].mxu0
        %311 = vmatprep.mubr.f32.mxu0 0.0
        %312 = vmatmul.mubr.f32.gmra.mrb[0].mxu0 %v231
        %v313 = vpop.f32.mrb[0].mxu0
        %v314 = vadd.f32 0.0, %v313
        %v315 = vpop.f32.mrb[0].mxu0
        %316 = vmatprep.mubr.f32.mxu0 0.0
        %317 = vmatmul.mubr.f32.gmra.mrb[0].mxu0 %v234
        %v318 = vpop.f32.mrb[0].mxu0
        %v319 = vadd.f32 0.0, %v318
        %v320 = vpop.f32.mrb[0].mxu0
        %321 = vmatprep.mubr.f32.mxu0 0.0
        %322 = vmatmul.mubr.f32.gmra.mrb[0].mxu0 %v237
        %v323 = vpop.f32.mrb[0].mxu0
        %v324 = vadd.f32 0.0, %v323
        %v325 = vpop.f32.mrb[0].mxu0
        %326 = vmatprep.mubr.f32.mxu0 0.0
        %327 = vmatmul.mubr.f32.gmra.mrb[0].mxu0 %v240
        %v328 = vpop.f32.mrb[0].mxu0
        %v329 = vadd.f32 0.0, %v328
        %v330 = vpop.f32.mrb[0].mxu0
        %331 = vdwg.mxu0
        %v332 = vld [vmem:[%s177] sm:$0xff]
        %v333 = vld [vmem:[%s177 + $0x8] sm:$0xff]
        %v334 = vld [vmem:[%s177 + $0x10] sm:$0xff]
        %v335 = vld [vmem:[%s177 + $0x18] sm:$0xff]
        %v336 = vld [vmem:[%s177 + $0x20] sm:$0xff]
        %v337 = vadd.f32 %v332, %v309
        %v338 = vadd.f32 %v333, %v314
        %v339 = vadd.f32 %v334, %v319
        %v340 = vadd.f32 %v335, %v324
        %v341 = vadd.f32 %v336, %v329
        %342 = vst [vmem:[%s204] sm:$0xff] %v337
        %343 = vst [vmem:[%s204 + $0x8] sm:$0xff] %v338
        %344 = vst [vmem:[%s204 + $0x10] sm:$0xff] %v339
        %345 = vst [vmem:[%s204 + $0x18] sm:$0xff] %v340
        %346 = vst [vmem:[%s204 + $0x20] sm:$0xff] %v341
        %s347 = sand.u32 %s101, 1
        %s348 = scalar_lea.sflag [#allocation4], %s347
        %s349 = sand.u32 %s101, 1
        %s350 = smul.addr %s349, 40
        %s351 = scalar_lea.vmem [#allocation5], %s350
        // Predicated region
        $region37: #{tpu_custom_call.1} parent=31 // pred_check
          %p352 = pneg %p111
        $region38: #{tpu_custom_call.1} parent=31 // pred_check_branch
          %354 = sbr.rel (%p352) target = $region40
        $region39: #{tpu_custom_call.1} parent=31 // pred_region
          %s355 = smul.u32 5, %s20
          %s357 = ssub.s32 640, 640
          %358 = vsyncadd %s348, %s357
          %s359 = smul.addr %s355, 128
          %s360 = scalar_lea.hbm %s3, %s359
          %s361 = sshll.u32 %s351, 4
          %s362 = int_to_ptr.vmem [resolvable:$true] %s361
          %367 = dma.vmem_to_hbm [thread:$0]  %s362, 640, %s360, %s348, 128, 128, 8
        $region40: #{tpu_custom_call.1} parent=31 // pred_fallthru
          _
      $region32: #{tpu_custom_call.1} parent=5 // pred_fallthru
        _
      %p368 = scmp.le.s32.totalorder 2, %s15
      // Predicated region
      $region41: #{tpu_custom_call.1} parent=5 // pred_check
        %p369 = pneg %p368
      $region42: #{tpu_custom_call.1} parent=5 // pred_check_branch
        %371 = sbr.rel (%p369) target = $region44
      $region43: #{tpu_custom_call.1} parent=5 // pred_region
        %s372 = ssub.s32 %s15, 2
        // Predicated region
        $region45: #{tpu_custom_call.1} parent=43 // pred_check
          %p373 = pneg %p117
        $region46: #{tpu_custom_call.1} parent=43 // pred_check_branch
          %375 = sbr.rel (%p373) target = $region48
        $region47: #{tpu_custom_call.1} parent=43 // pred_region
          %s376 = sand.u32 %s102, 1
          %s377 = scalar_lea.sflag [#allocation4], %s376
          %s378 = sand.u32 %s102, 1
          %s379 = smul.addr %s378, 40
          %s380 = scalar_lea.vmem [#allocation5], %s379
          %381 = dma.done %s377, 640
        $region48: #{tpu_custom_call.1} parent=43 // pred_fallthru
          _
      $region44: #{tpu_custom_call.1} parent=5 // pred_fallthru
        _
    $region6: #{tpu_custom_call.1} parent=1 // loop_footer
      %s19 = sadd.s32 1, %s15
    $region7: #{tpu_custom_call.1} parent=1 // loop_footer_branch
      %14 = sbr.rel target = $region3
    $region8: #{tpu_custom_call.1} parent=1 // loop_exit
      _
    %382 = vsyncpa [#allocation3], 1
    %s383 = scalar_lea.sflag [#allocation3], 1
    %384 = vsyncpa %s383, 1
    %385 = vsyncpa [#allocation4], 1
    %s386 = scalar_lea.sflag [#allocation4], 1
    %387 = vsyncpa %s386, 1

</llo_original>
